<compile_context>
chip_gen: v7x
topology: tpu7x:2x2x1
jax: 0.10.0
libtpu: 0.0.40
codegen_flags: <defaults>
</compile_context>

<pallas_src>
import functools

import jax
import jax.numpy as jnp
from jax.experimental import pallas as pl
from jax.experimental.pallas import tpu as pltpu

_LANE = 128
_MAX_TILE_ROWS = 512                        # 512*128*4B = 256 KiB per input block
_CACHE_BUDGET_BYTES = 24 * 1024 * 1024      # |diff| VMEM slab cap (v7x-safe)
_VMEM_LIMIT_BYTES = 32 * 1024 * 1024        # fits v5e/v6e/v7x physical VMEM


def _round_up(x, m):
    return (x + m - 1) // m * m


def _berhu_kernel(pred_ref, gt_ref, loss_ref, *scratch,
                  threshold, n_valid, tile_rows, lane, use_cache):
    """grid = (2, n_tiles), both axes sequential ('arbitrary').

    pass 0 (p==0): running max(pred-gt), running sum(|diff|); cache |diff| in VMEM.
    pass 1 (p==1): masked sum(|diff|^2) and masked count using huber_c from pass 0;
                   emit the final scalar loss on the last tile.
    """
    if use_cache:
        adiff_cache, max_acc, sum_acc, sq_acc, cnt_acc = scratch
    else:
        adiff_cache = None
        max_acc, sum_acc, sq_acc, cnt_acc = scratch

    p = pl.program_id(0)
    t = pl.program_id(1)
    n_tiles = pl.num_programs(1)
    is_last = t == n_tiles - 1

    @pl.when(jnp.logical_and(p == 0, t == 0))
    def _init():
        max_acc[...] = jnp.full_like(max_acc, -jnp.inf)
        sum_acc[...] = jnp.zeros_like(sum_acc)
        sq_acc[...] = jnp.zeros_like(sq_acc)
        cnt_acc[...] = jnp.zeros_like(cnt_acc)

    def _valid_mask(shape):
        # Only called on the last tile: excludes lane-padding zeros and the
        # undefined contents of a ragged final block.
        row = jax.lax.broadcasted_iota(jnp.int32, shape, 0)
        col = jax.lax.broadcasted_iota(jnp.int32, shape, 1)
        flat = (t * tile_rows + row) * lane + col
        return flat < n_valid

    @pl.when(p == 0)
    def _pass0():
        d = pred_ref[...].astype(jnp.float32) - gt_ref[...].astype(jnp.float32)
        ad = jnp.abs(d)
        if use_cache:
            off = pl.multiple_of(t * tile_rows, tile_rows)
            adiff_cache[pl.ds(off, tile_rows), :] = ad

        def _accum(d_sel, ad_sel):
            max_acc[...] = jnp.maximum(
                max_acc[...], jnp.max(d_sel, axis=0, keepdims=True))
            sum_acc[...] = sum_acc[...] + jnp.sum(ad_sel, axis=0, keepdims=True)

        @pl.when(jnp.logical_not(is_last))
        def _interior():
            _accum(d, ad)

        @pl.when(is_last)
        def _tail():
            valid = _valid_mask(d.shape)
            _accum(jnp.where(valid, d, -jnp.inf), jnp.where(valid, ad, 0.0))

    @pl.when(p == 1)
    def _pass1():
        huber_c = jnp.float32(threshold) * jnp.max(max_acc[...])
        if use_cache:
            off = pl.multiple_of(t * tile_rows, tile_rows)
            ad = adiff_cache[pl.ds(off, tile_rows), :]
        else:
            ad = jnp.abs(pred_ref[...].astype(jnp.float32)
                         - gt_ref[...].astype(jnp.float32))

        def _accum(mask):
            sq_acc[...] = sq_acc[...] + jnp.sum(
                jnp.where(mask, ad * ad, 0.0), axis=0, keepdims=True)
            cnt_acc[...] = cnt_acc[...] + jnp.sum(
                mask.astype(jnp.float32), axis=0, keepdims=True)

        @pl.when(jnp.logical_not(is_last))
        def _interior():
            _accum(ad > huber_c)

        @pl.when(is_last)
        def _tail():
            _accum(jnp.logical_and(ad > huber_c, _valid_mask(ad.shape)))

    @pl.when(jnp.logical_and(p == 1, is_last))
    def _finalize():
        numer = jnp.sum(sum_acc[...]) + jnp.sum(sq_acc[...])
        denom = jnp.float32(n_valid) + jnp.sum(cnt_acc[...])
        loss_ref[0, 0] = numer / denom


def berhu_loss(pred, gt, threshold=0.2, *, use_vmem_cache=None,
               max_tile_rows=_MAX_TILE_ROWS):
    assert pred.shape == gt.shape, "pred/gt must have the same shape"
    n = int(pred.size)
    assert n > 0, "empty input"

    # Flatten row-major; pad only to the 128-lane boundary (and only if needed —
    # a free reshape for typical B*1*H*W depth maps where numel % 128 == 0).
    pred_flat = pred.reshape(-1)
    gt_flat = gt.reshape(-1)
    padded_n = _round_up(n, _LANE)
    if padded_n != n:
        pred_flat = jnp.pad(pred_flat, (0, padded_n - n))
        gt_flat = jnp.pad(gt_flat, (0, padded_n - n))
    rows = padded_n // _LANE
    pred2 = pred_flat.reshape(rows, _LANE)
    gt2 = gt_flat.reshape(rows, _LANE)

    # Block rows: either the full row extent (always a legal block shape) or a
    # large multiple-of-8 tile; the ragged last tile is handled by the mask.
    if rows <= max_tile_rows:
        tile_rows = rows
    else:
        tile_rows = max_tile_rows
    n_tiles = pl.cdiv(rows, tile_rows)

    cache_rows = n_tiles * tile_rows
    cache_bytes = cache_rows * _LANE * 4
    if use_vmem_cache is None:
        use_cache = cache_bytes <= _CACHE_BUDGET_BYTES
    else:
        use_cache = bool(use_vmem_cache) and cache_bytes <= _CACHE_BUDGET_BYTES

    kernel = functools.partial(
        _berhu_kernel,
        threshold=float(threshold),
        n_valid=n,
        tile_rows=tile_rows,
        lane=_LANE,
        use_cache=use_cache,
    )

    scratch_shapes = []
    if use_cache:
        scratch_shapes.append(pltpu.VMEM((cache_rows, _LANE), jnp.float32))
    scratch_shapes += [pltpu.VMEM((1, _LANE), jnp.float32)] * 4  # max/sum/sq/cnt

    if use_cache:
        # pass 0: walk the tiles; pass 1: pin inputs to block 0 (no re-DMA).
        in_idx = lambda p, t: ((1 - p) * t, 0)
    else:
        in_idx = lambda p, t: (t, 0)

    out = pl.pallas_call(
        kernel,
        out_shape=jax.ShapeDtypeStruct((1, 1), jnp.float32),
        grid_spec=pltpu.PrefetchScalarGridSpec(
            num_scalar_prefetch=0,
            grid=(2, n_tiles),
            in_specs=[
                pl.BlockSpec((tile_rows, _LANE), in_idx),
                pl.BlockSpec((tile_rows, _LANE), in_idx),
            ],
            out_specs=pl.BlockSpec(memory_space=pltpu.MemorySpace.SMEM),
            scratch_shapes=scratch_shapes,
        ),
        compiler_params=pltpu.CompilerParams(
            # Accumulators are carried across both grid axes -> sequential.
            dimension_semantics=("arbitrary", "arbitrary"),
            vmem_limit_bytes=_VMEM_LIMIT_BYTES,
        ),
    )(pred2, gt2)
    return out[0, 0]


class BerHuLoss:
    """JAX/Pallas re-implementation of the PyTorch BerHuLoss module."""

    def __init__(self, threshold=0.2):
        self.threshold = threshold

    def __call__(self, pred, gt):
        return berhu_loss(pred, gt, self.threshold)


def _reference_berhu(pred, gt, threshold=0.2):
    d = pred.astype(jnp.float32) - gt.astype(jnp.float32)
    huber_c = threshold * jnp.max(d)
    diff = jnp.abs(d)
    mask = diff > huber_c
    numer = jnp.sum(diff) + jnp.sum(jnp.where(mask, diff * diff, 0.0))
    denom = jnp.float32(diff.size) + jnp.sum(mask.astype(jnp.float32))
    return numer / denom


if __name__ == "__main__":
    key = jax.random.PRNGKey(0)
    k1, k2 = jax.random.split(key)
    # pred / gt: [B, 1, H, W] inverse depth maps
    pred = jax.random.uniform(k1, (2, 1, 16, 16), dtype=jnp.float32)
    gt = jax.random.uniform(k2, (2, 1, 16, 16), dtype=jnp.float32)

    loss_fn = BerHuLoss(threshold=0.2)
    loss = jax.block_until_ready(loss_fn(pred, gt))
    ref = jax.block_until_ready(_reference_berhu(pred, gt, 0.2))
    assert jnp.isfinite(loss), "kernel produced non-finite loss"
    assert jnp.allclose(loss, ref, rtol=1e-5, atol=1e-6), (loss, ref)

    # Exercise the no-cache (HBM re-read) fallback path on the same data.
    loss_nc = jax.block_until_ready(
        berhu_loss(pred, gt, 0.2, use_vmem_cache=False))
    assert jnp.allclose(loss_nc, ref, rtol=1e-5, atol=1e-6), (loss_nc, ref)

    # Non-lane-aligned input: exercises the lane-pad + last-tile validity mask.
    k3, k4 = jax.random.split(k2)
    pred_odd = jax.random.uniform(k3, (2, 1, 15, 17), dtype=jnp.float32)
    gt_odd = jax.random.uniform(k4, (2, 1, 15, 17), dtype=jnp.float32)
    loss_odd = jax.block_until_ready(loss_fn(pred_odd, gt_odd))
    ref_odd = jax.block_until_ready(_reference_berhu(pred_odd, gt_odd, 0.2))
    assert jnp.allclose(loss_odd, ref_odd, rtol=1e-5, atol=1e-6), (loss_odd, ref_odd)

    # Multi-tile + ragged last block (small tile override), cached and uncached.
    k5, k6 = jax.random.split(k4)
    pred_mt = jax.random.uniform(k5, (2, 1, 60, 64), dtype=jnp.float32)
    gt_mt = jax.random.uniform(k6, (2, 1, 60, 64), dtype=jnp.float32)
    ref_mt = jax.block_until_ready(_reference_berhu(pred_mt, gt_mt, 0.2))
    loss_mt = jax.block_until_ready(
        berhu_loss(pred_mt, gt_mt, 0.2, max_tile_rows=8))
    assert jnp.allclose(loss_mt, ref_mt, rtol=1e-5, atol=1e-6), (loss_mt, ref_mt)
    loss_mt_nc = jax.block_until_ready(
        berhu_loss(pred_mt, gt_mt, 0.2, use_vmem_cache=False, max_tile_rows=8))
    assert jnp.allclose(loss_mt_nc, ref_mt, rtol=1e-5, atol=1e-6), (loss_mt_nc, ref_mt)

    print("KERNEL_OK")
</pallas_src>

<mosaic_0001>
module attributes {stable_mosaic.version = 11 : i64} {
  func.func @_berhu_kernel(%arg0: i32, %arg1: i32, %arg2: memref<4x128xf32, #tpu.memory_space<vmem>>, %arg3: memref<4x128xf32, #tpu.memory_space<vmem>>, %arg4: memref<1x1xf32, #tpu.memory_space<smem>>, %arg5: memref<4x128xf32, #tpu.memory_space<vmem>>, %arg6: memref<1x128xf32, #tpu.memory_space<vmem>>, %arg7: memref<1x128xf32, #tpu.memory_space<vmem>>, %arg8: memref<1x128xf32, #tpu.memory_space<vmem>>, %arg9: memref<1x128xf32, #tpu.memory_space<vmem>>) attributes {dimension_semantics = [#tpu.dimension_semantics<arbitrary>, #tpu.dimension_semantics<arbitrary>], iteration_bounds = array<i64: 2, 1>, scalar_prefetch = 0 : i64, scratch_operands = 5 : i64, tpu.core_type = #tpu.core_type<tc>, window_params = [{transform_indices = @transform_0, window_bounds = array<i64: 4, 128>}, {transform_indices = @transform_1, window_bounds = array<i64: 4, 128>}, {transform_indices = @transform_2, window_bounds = array<i64: 1, 1>}]} {
    %c0_i32 = arith.constant 0 : i32
    %0 = arith.cmpi eq, %arg1, %c0_i32 : i32
    %c0_i32_0 = arith.constant 0 : i32
    %1 = arith.cmpi eq, %arg0, %c0_i32_0 : i32
    %c0_i32_1 = arith.constant 0 : i32
    %2 = arith.cmpi eq, %arg1, %c0_i32_1 : i32
    %3 = arith.andi %1, %2 : i1
    %4 = arith.extui %3 : i1 to i32
    %c0_i32_2 = arith.constant 0 : i32
    %5 = arith.cmpi ne, %4, %c0_i32_2 : i32
    scf.if %5 {
      %cst = arith.constant 0xFF800000 : f32
      %16 = vector.broadcast %cst : f32 to vector<1x128xf32>
      %c0 = arith.constant 0 : index
      %c0_8 = arith.constant 0 : index
      %17 = vector.load %arg6[%c0, %c0_8] : memref<1x128xf32, #tpu.memory_space<vmem>>, vector<1x128xf32>
      tpu.vector_store %arg6[%c0, %c0_8], %16 {strides = array<i32>} : memref<1x128xf32, #tpu.memory_space<vmem>>, vector<1x128xf32>,
      %cst_9 = arith.constant 0.000000e+00 : f32
      %18 = vector.broadcast %cst_9 : f32 to vector<1x128xf32>
      %c0_10 = arith.constant 0 : index
      %c0_11 = arith.constant 0 : index
      %19 = vector.load %arg7[%c0_10, %c0_11] : memref<1x128xf32, #tpu.memory_space<vmem>>, vector<1x128xf32>
      tpu.vector_store %arg7[%c0_10, %c0_11], %18 {strides = array<i32>} : memref<1x128xf32, #tpu.memory_space<vmem>>, vector<1x128xf32>,
      %cst_12 = arith.constant 0.000000e+00 : f32
      %20 = vector.broadcast %cst_12 : f32 to vector<1x128xf32>
      %c0_13 = arith.constant 0 : index
      %c0_14 = arith.constant 0 : index
      %21 = vector.load %arg8[%c0_13, %c0_14] : memref<1x128xf32, #tpu.memory_space<vmem>>, vector<1x128xf32>
      tpu.vector_store %arg8[%c0_13, %c0_14], %20 {strides = array<i32>} : memref<1x128xf32, #tpu.memory_space<vmem>>, vector<1x128xf32>,
      %cst_15 = arith.constant 0.000000e+00 : f32
      %22 = vector.broadcast %cst_15 : f32 to vector<1x128xf32>
      %c0_16 = arith.constant 0 : index
      %c0_17 = arith.constant 0 : index
      %23 = vector.load %arg9[%c0_16, %c0_17] : memref<1x128xf32, #tpu.memory_space<vmem>>, vector<1x128xf32>
      tpu.vector_store %arg9[%c0_16, %c0_17], %22 {strides = array<i32>} : memref<1x128xf32, #tpu.memory_space<vmem>>, vector<1x128xf32>,
    } else {
    }
    %c0_i32_3 = arith.constant 0 : i32
    %6 = arith.cmpi eq, %arg0, %c0_i32_3 : i32
    %7 = arith.extui %6 : i1 to i32
    %c0_i32_4 = arith.constant 0 : i32
    %8 = arith.cmpi ne, %7, %c0_i32_4 : i32
    scf.if %8 {
      %c0 = arith.constant 0 : index
      %c0_8 = arith.constant 0 : index
      %16 = vector.load %arg2[%c0, %c0_8] : memref<4x128xf32, #tpu.memory_space<vmem>>, vector<4x128xf32>
      %c0_9 = arith.constant 0 : index
      %c0_10 = arith.constant 0 : index
      %17 = vector.load %arg3[%c0_9, %c0_10] : memref<4x128xf32, #tpu.memory_space<vmem>>, vector<4x128xf32>
      %18 = arith.subf %16, %17 : vector<4x128xf32>
      %19 = math.absf %18 : vector<4x128xf32>
      %c4_i32 = arith.constant 4 : i32
      %20 = arith.muli %arg1, %c4_i32 : i32
      %21 = tpu.assume_multiple %20, 4 : i32
      %22 = arith.index_cast %21 : i32 to index
      %c0_11 = arith.constant 0 : index
      %23 = vector.load %arg5[%22, %c0_11] : memref<4x128xf32, #tpu.memory_space<vmem>>, vector<4x128xf32>
      tpu.vector_store %arg5[%22, %c0_11], %19 {strides = array<i32>} : memref<4x128xf32, #tpu.memory_space<vmem>>, vector<4x128xf32>,
      %true = arith.constant true
      %24 = arith.xori %0, %true : i1
      %25 = arith.extui %24 : i1 to i32
      %c0_i32_12 = arith.constant 0 : i32
      %26 = arith.cmpi ne, %25, %c0_i32_12 : i32
      scf.if %26 {
        %c0_14 = arith.constant 0 : index
        %c0_15 = arith.constant 0 : index
        %29 = vector.load %arg6[%c0_14, %c0_15] : memref<1x128xf32, #tpu.memory_space<vmem>>, vector<1x128xf32>
        %cst = arith.constant dense<0xFF800000> : vector<128xf32>
        %30 = vector.multi_reduction <maximumf>, %18, %cst [0] : vector<4x128xf32> to vector<128xf32>
        %31 = vector.shape_cast %30 : vector<128xf32> to vector<1x128xf32>
        %32 = arith.maximumf %29, %31 : vector<1x128xf32>
        %c0_16 = arith.constant 0 : index
        %c0_17 = arith.constant 0 : index
        %33 = vector.load %arg6[%c0_16, %c0_17] : memref<1x128xf32, #tpu.memory_space<vmem>>, vector<1x128xf32>
        tpu.vector_store %arg6[%c0_16, %c0_17], %32 {strides = array<i32>} : memref<1x128xf32, #tpu.memory_space<vmem>>, vector<1x128xf32>,
        %c0_18 = arith.constant 0 : index
        %c0_19 = arith.constant 0 : index
        %34 = vector.load %arg7[%c0_18, %c0_19] : memref<1x128xf32, #tpu.memory_space<vmem>>, vector<1x128xf32>
        %cst_20 = arith.constant dense<0.000000e+00> : vector<128xf32>
        %35 = vector.multi_reduction <add>, %19, %cst_20 [0] : vector<4x128xf32> to vector<128xf32>
        %36 = vector.shape_cast %35 : vector<128xf32> to vector<1x128xf32>
        %37 = arith.addf %34, %36 : vector<1x128xf32>
        %c0_21 = arith.constant 0 : index
        %c0_22 = arith.constant 0 : index
        %38 = vector.load %arg7[%c0_21, %c0_22] : memref<1x128xf32, #tpu.memory_space<vmem>>, vector<1x128xf32>
        tpu.vector_store %arg7[%c0_21, %c0_22], %37 {strides = array<i32>} : memref<1x128xf32, #tpu.memory_space<vmem>>, vector<1x128xf32>,
      } else {
      }
      %27 = arith.extui %0 : i1 to i32
      %c0_i32_13 = arith.constant 0 : i32
      %28 = arith.cmpi ne, %27, %c0_i32_13 : i32
      scf.if %28 {
        %29 = tpu.iota {dimensions = array<i32: 0>} : vector<4x128xi32>
        %30 = tpu.iota {dimensions = array<i32: 1>} : vector<4x128xi32>
        %c4_i32_14 = arith.constant 4 : i32
        %31 = arith.muli %arg1, %c4_i32_14 : i32
        %32 = vector.broadcast %31 : i32 to vector<4x128xi32>
        %33 = arith.addi %32, %29 : vector<4x128xi32>
        %c128_i32 = arith.constant 128 : i32
        %34 = vector.broadcast %c128_i32 : i32 to vector<4x128xi32>
        %35 = arith.muli %33, %34 : vector<4x128xi32>
        %36 = arith.addi %35, %30 : vector<4x128xi32>
        %c512_i32 = arith.constant 512 : i32
        %37 = vector.broadcast %c512_i32 : i32 to vector<4x128xi32>
        %38 = arith.cmpi slt, %36, %37 : vector<4x128xi32>
        %cst = arith.constant 0xFF800000 : f32
        %39 = vector.broadcast %cst : f32 to vector<4x128xf32>
        %40 = arith.select %38, %18, %39 : vector<4x128xi1>, vector<4x128xf32>
        %cst_15 = arith.constant 0.000000e+00 : f32
        %41 = vector.broadcast %cst_15 : f32 to vector<4x128xf32>
        %42 = arith.select %38, %19, %41 : vector<4x128xi1>, vector<4x128xf32>
        %c0_16 = arith.constant 0 : index
        %c0_17 = arith.constant 0 : index
        %43 = vector.load %arg6[%c0_16, %c0_17] : memref<1x128xf32, #tpu.memory_space<vmem>>, vector<1x128xf32>
        %cst_18 = arith.constant dense<0xFF800000> : vector<128xf32>
        %44 = vector.multi_reduction <maximumf>, %40, %cst_18 [0] : vector<4x128xf32> to vector<128xf32>
        %45 = vector.shape_cast %44 : vector<128xf32> to vector<1x128xf32>
        %46 = arith.maximumf %43, %45 : vector<1x128xf32>
        %c0_19 = arith.constant 0 : index
        %c0_20 = arith.constant 0 : index
        %47 = vector.load %arg6[%c0_19, %c0_20] : memref<1x128xf32, #tpu.memory_space<vmem>>, vector<1x128xf32>
        tpu.vector_store %arg6[%c0_19, %c0_20], %46 {strides = array<i32>} : memref<1x128xf32, #tpu.memory_space<vmem>>, vector<1x128xf32>,
        %c0_21 = arith.constant 0 : index
        %c0_22 = arith.constant 0 : index
        %48 = vector.load %arg7[%c0_21, %c0_22] : memref<1x128xf32, #tpu.memory_space<vmem>>, vector<1x128xf32>
        %cst_23 = arith.constant dense<0.000000e+00> : vector<128xf32>
        %49 = vector.multi_reduction <add>, %42, %cst_23 [0] : vector<4x128xf32> to vector<128xf32>
        %50 = vector.shape_cast %49 : vector<128xf32> to vector<1x128xf32>
        %51 = arith.addf %48, %50 : vector<1x128xf32>
        %c0_24 = arith.constant 0 : index
        %c0_25 = arith.constant 0 : index
        %52 = vector.load %arg7[%c0_24, %c0_25] : memref<1x128xf32, #tpu.memory_space<vmem>>, vector<1x128xf32>
        tpu.vector_store %arg7[%c0_24, %c0_25], %51 {strides = array<i32>} : memref<1x128xf32, #tpu.memory_space<vmem>>, vector<1x128xf32>,
      } else {
      }
    } else {
    }
    %c1_i32 = arith.constant 1 : i32
    %9 = arith.cmpi eq, %arg0, %c1_i32 : i32
    %10 = arith.extui %9 : i1 to i32
    %c0_i32_5 = arith.constant 0 : i32
    %11 = arith.cmpi ne, %10, %c0_i32_5 : i32
    scf.if %11 {
      %c0 = arith.constant 0 : index
      %c0_8 = arith.constant 0 : index
      %16 = vector.load %arg6[%c0, %c0_8] : memref<1x128xf32, #tpu.memory_space<vmem>>, vector<1x128xf32>
      %17 = vector.shape_cast %16 : vector<1x128xf32> to vector<1x1x128xf32>
      %cst = arith.constant dense<0xFF800000> : vector<1xf32>
      %18 = vector.multi_reduction <maximumf>, %17, %cst [1, 2] : vector<1x1x128xf32> to vector<1xf32>
      %19 = vector.shape_cast %18 : vector<1xf32> to vector<1x1x1xf32>
      %20 = vector.extract %19[0, 0, 0] : f32 from vector<1x1x1xf32>
      %cst_9 = arith.constant 2.000000e-01 : f32
      %21 = arith.mulf %cst_9, %20 : f32
      %c4_i32 = arith.constant 4 : i32
      %22 = arith.muli %arg1, %c4_i32 : i32
      %23 = tpu.assume_multiple %22, 4 : i32
      %24 = arith.index_cast %23 : i32 to index
      %c0_10 = arith.constant 0 : index
      %25 = vector.load %arg5[%24, %c0_10] : memref<4x128xf32, #tpu.memory_space<vmem>>, vector<4x128xf32>
      %true = arith.constant true
      %26 = arith.xori %0, %true : i1
      %27 = arith.extui %26 : i1 to i32
      %c0_i32_11 = arith.constant 0 : i32
      %28 = arith.cmpi ne, %27, %c0_i32_11 : i32
      scf.if %28 {
        %31 = vector.broadcast %21 : f32 to vector<4x128xf32>
        %32 = arith.cmpf ogt, %25, %31 : vector<4x128xf32>
        %c0_13 = arith.constant 0 : index
        %c0_14 = arith.constant 0 : index
        %33 = vector.load %arg8[%c0_13, %c0_14] : memref<1x128xf32, #tpu.memory_space<vmem>>, vector<1x128xf32>
        %34 = arith.mulf %25, %25 : vector<4x128xf32>
        %cst_15 = arith.constant 0.000000e+00 : f32
        %35 = vector.broadcast %cst_15 : f32 to vector<4x128xf32>
        %36 = arith.select %32, %34, %35 : vector<4x128xi1>, vector<4x128xf32>
        %cst_16 = arith.constant dense<0.000000e+00> : vector<128xf32>
        %37 = vector.multi_reduction <add>, %36, %cst_16 [0] : vector<4x128xf32> to vector<128xf32>
        %38 = vector.shape_cast %37 : vector<128xf32> to vector<1x128xf32>
        %39 = arith.addf %33, %38 : vector<1x128xf32>
        %c0_17 = arith.constant 0 : index
        %c0_18 = arith.constant 0 : index
        %40 = vector.load %arg8[%c0_17, %c0_18] : memref<1x128xf32, #tpu.memory_space<vmem>>, vector<1x128xf32>
        tpu.vector_store %arg8[%c0_17, %c0_18], %39 {strides = array<i32>} : memref<1x128xf32, #tpu.memory_space<vmem>>, vector<1x128xf32>,
        %c0_19 = arith.constant 0 : index
        %c0_20 = arith.constant 0 : index
        %41 = vector.load %arg9[%c0_19, %c0_20] : memref<1x128xf32, #tpu.memory_space<vmem>>, vector<1x128xf32>
        %42 = arith.extui %32 : vector<4x128xi1> to vector<4x128xi32>
        %43 = arith.sitofp %42 : vector<4x128xi32> to vector<4x128xf32>
        %cst_21 = arith.constant dense<0.000000e+00> : vector<128xf32>
        %44 = vector.multi_reduction <add>, %43, %cst_21 [0] : vector<4x128xf32> to vector<128xf32>
        %45 = vector.shape_cast %44 : vector<128xf32> to vector<1x128xf32>
        %46 = arith.addf %41, %45 : vector<1x128xf32>
        %c0_22 = arith.constant 0 : index
        %c0_23 = arith.constant 0 : index
        %47 = vector.load %arg9[%c0_22, %c0_23] : memref<1x128xf32, #tpu.memory_space<vmem>>, vector<1x128xf32>
        tpu.vector_store %arg9[%c0_22, %c0_23], %46 {strides = array<i32>} : memref<1x128xf32, #tpu.memory_space<vmem>>, vector<1x128xf32>,
      } else {
      }
      %29 = arith.extui %0 : i1 to i32
      %c0_i32_12 = arith.constant 0 : i32
      %30 = arith.cmpi ne, %29, %c0_i32_12 : i32
      scf.if %30 {
        %31 = vector.broadcast %21 : f32 to vector<4x128xf32>
        %32 = arith.cmpf ogt, %25, %31 : vector<4x128xf32>
        %33 = tpu.iota {dimensions = array<i32: 0>} : vector<4x128xi32>
        %34 = tpu.iota {dimensions = array<i32: 1>} : vector<4x128xi32>
        %c4_i32_13 = arith.constant 4 : i32
        %35 = arith.muli %arg1, %c4_i32_13 : i32
        %36 = vector.broadcast %35 : i32 to vector<4x128xi32>
        %37 = arith.addi %36, %33 : vector<4x128xi32>
        %c128_i32 = arith.constant 128 : i32
        %38 = vector.broadcast %c128_i32 : i32 to vector<4x128xi32>
        %39 = arith.muli %37, %38 : vector<4x128xi32>
        %40 = arith.addi %39, %34 : vector<4x128xi32>
        %c512_i32 = arith.constant 512 : i32
        %41 = vector.broadcast %c512_i32 : i32 to vector<4x128xi32>
        %42 = arith.cmpi slt, %40, %41 : vector<4x128xi32>
        %43 = arith.andi %32, %42 : vector<4x128xi1>
        %c0_14 = arith.constant 0 : index
        %c0_15 = arith.constant 0 : index
        %44 = vector.load %arg8[%c0_14, %c0_15] : memref<1x128xf32, #tpu.memory_space<vmem>>, vector<1x128xf32>
        %45 = arith.mulf %25, %25 : vector<4x128xf32>
        %cst_16 = arith.constant 0.000000e+00 : f32
        %46 = vector.broadcast %cst_16 : f32 to vector<4x128xf32>
        %47 = arith.select %43, %45, %46 : vector<4x128xi1>, vector<4x128xf32>
        %cst_17 = arith.constant dense<0.000000e+00> : vector<128xf32>
        %48 = vector.multi_reduction <add>, %47, %cst_17 [0] : vector<4x128xf32> to vector<128xf32>
        %49 = vector.shape_cast %48 : vector<128xf32> to vector<1x128xf32>
        %50 = arith.addf %44, %49 : vector<1x128xf32>
        %c0_18 = arith.constant 0 : index
        %c0_19 = arith.constant 0 : index
        %51 = vector.load %arg8[%c0_18, %c0_19] : memref<1x128xf32, #tpu.memory_space<vmem>>, vector<1x128xf32>
        tpu.vector_store %arg8[%c0_18, %c0_19], %50 {strides = array<i32>} : memref<1x128xf32, #tpu.memory_space<vmem>>, vector<1x128xf32>,
        %c0_20 = arith.constant 0 : index
        %c0_21 = arith.constant 0 : index
        %52 = vector.load %arg9[%c0_20, %c0_21] : memref<1x128xf32, #tpu.memory_space<vmem>>, vector<1x128xf32>
        %53 = arith.extui %43 : vector<4x128xi1> to vector<4x128xi32>
        %54 = arith.sitofp %53 : vector<4x128xi32> to vector<4x128xf32>
        %cst_22 = arith.constant dense<0.000000e+00> : vector<128xf32>
        %55 = vector.multi_reduction <add>, %54, %cst_22 [0] : vector<4x128xf32> to vector<128xf32>
        %56 = vector.shape_cast %55 : vector<128xf32> to vector<1x128xf32>
        %57 = arith.addf %52, %56 : vector<1x128xf32>
        %c0_23 = arith.constant 0 : index
        %c0_24 = arith.constant 0 : index
        %58 = vector.load %arg9[%c0_23, %c0_24] : memref<1x128xf32, #tpu.memory_space<vmem>>, vector<1x128xf32>
        tpu.vector_store %arg9[%c0_23, %c0_24], %57 {strides = array<i32>} : memref<1x128xf32, #tpu.memory_space<vmem>>, vector<1x128xf32>,
      } else {
      }
    } else {
    }
    %c1_i32_6 = arith.constant 1 : i32
    %12 = arith.cmpi eq, %arg0, %c1_i32_6 : i32
    %13 = arith.andi %12, %0 : i1
    %14 = arith.extui %13 : i1 to i32
    %c0_i32_7 = arith.constant 0 : i32
    %15 = arith.cmpi ne, %14, %c0_i32_7 : i32
    scf.if %15 {
      %c0 = arith.constant 0 : index
      %c0_8 = arith.constant 0 : index
      %16 = vector.load %arg7[%c0, %c0_8] : memref<1x128xf32, #tpu.memory_space<vmem>>, vector<1x128xf32>
      %17 = vector.shape_cast %16 : vector<1x128xf32> to vector<1x1x128xf32>
      %cst = arith.constant dense<0.000000e+00> : vector<1xf32>
      %18 = vector.multi_reduction <add>, %17, %cst [1, 2] : vector<1x1x128xf32> to vector<1xf32>
      %19 = vector.shape_cast %18 : vector<1xf32> to vector<1x1x1xf32>
      %20 = vector.extract %19[0, 0, 0] : f32 from vector<1x1x1xf32>
      %c0_9 = arith.constant 0 : index
      %c0_10 = arith.constant 0 : index
      %21 = vector.load %arg8[%c0_9, %c0_10] : memref<1x128xf32, #tpu.memory_space<vmem>>, vector<1x128xf32>
      %22 = vector.shape_cast %21 : vector<1x128xf32> to vector<1x1x128xf32>
      %cst_11 = arith.constant dense<0.000000e+00> : vector<1xf32>
      %23 = vector.multi_reduction <add>, %22, %cst_11 [1, 2] : vector<1x1x128xf32> to vector<1xf32>
      %24 = vector.shape_cast %23 : vector<1xf32> to vector<1x1x1xf32>
      %25 = vector.extract %24[0, 0, 0] : f32 from vector<1x1x1xf32>
      %26 = arith.addf %20, %25 : f32
      %c0_12 = arith.constant 0 : index
      %c0_13 = arith.constant 0 : index
      %27 = vector.load %arg9[%c0_12, %c0_13] : memref<1x128xf32, #tpu.memory_space<vmem>>, vector<1x128xf32>
      %28 = vector.shape_cast %27 : vector<1x128xf32> to vector<1x1x128xf32>
      %cst_14 = arith.constant dense<0.000000e+00> : vector<1xf32>
      %29 = vector.multi_reduction <add>, %28, %cst_14 [1, 2] : vector<1x1x128xf32> to vector<1xf32>
      %30 = vector.shape_cast %29 : vector<1xf32> to vector<1x1x1xf32>
      %31 = vector.extract %30[0, 0, 0] : f32 from vector<1x1x1xf32>
      %cst_15 = arith.constant 5.120000e+02 : f32
      %32 = arith.addf %cst_15, %31 : f32
      %33 = arith.divf %26, %32 : f32
      %c0_16 = arith.constant 0 : index
      %c0_17 = arith.constant 0 : index
      %34 = memref.load %arg4[%c0_16, %c0_17] : memref<1x1xf32, #tpu.memory_space<smem>>
      memref.store %33, %arg4[%c0_16, %c0_17] : memref<1x1xf32, #tpu.memory_space<smem>>
    } else {
    }
    return
  }
  func.func @transform_0(%arg0: i32, %arg1: i32) -> (i32, i32) {
    %c1_i32 = arith.constant 1 : i32
    %0 = arith.subi %c1_i32, %arg0 : i32
    %1 = arith.muli %0, %arg1 : i32
    %c0_i32 = arith.constant 0 : i32
    %c0_i32_0 = arith.constant 0 : i32
    return %1, %c0_i32 : i32, i32
  }
  func.func @transform_1(%arg0: i32, %arg1: i32) -> (i32, i32) {
    %c1_i32 = arith.constant 1 : i32
    %0 = arith.subi %c1_i32, %arg0 : i32
    %1 = arith.muli %0, %arg1 : i32
    %c0_i32 = arith.constant 0 : i32
    %c0_i32_0 = arith.constant 0 : i32
    return %1, %c0_i32 : i32, i32
  }
  func.func @transform_2(%arg0: i32, %arg1: i32) -> (i32, i32) {
    %c0_i32 = arith.constant 0 : i32
    %c0_i32_0 = arith.constant 0 : i32
    %c0_i32_1 = arith.constant 0 : i32
    return %c0_i32, %c0_i32_0 : i32, i32
  }
}

</mosaic_0001>

<llo_original>
// kernel: tpu_custom_call.1
$region0: #{tpu_custom_call.1}
  #allocation0 [shape = 'u32[]', space=smem, size = 0x4, offset = 0x4, fixed_abs, tag = 'smem constant byte address 0x4 - core index']
  #allocation1 [shape = 'u32[144,128]{1,0:T(1,128)}', space=vmem, size = 0x12000, scoped, tag = 'internal scratch']
  #allocation2 [shape = 'f32[4,128]{1,0:T(4,128)}', space=vmem, size = 0x800, scoped, tag = 'scratch operand']
  #allocation3 [shape = 'f32[1,128]{1,0:T(1,128)}', space=vmem, size = 0x200, scoped, tag = 'scratch operand']
  #allocation4 [shape = 'f32[1,128]{1,0:T(1,128)}', space=vmem, size = 0x200, scoped, tag = 'scratch operand']
  #allocation5 [shape = 'f32[1,128]{1,0:T(1,128)}', space=vmem, size = 0x200, scoped, tag = 'scratch operand']
  #allocation6 [shape = 'f32[1,128]{1,0:T(1,128)}', space=vmem, size = 0x200, scoped, tag = 'scratch operand']
  %s0 = inlined_call_operand.hbm [shape: f32[4,128], index: 0, kind: input, shape index: {}]
  %s1 = inlined_call_operand.hbm [shape: f32[4,128], index: 1, kind: input, shape index: {}]
  %s2 = inlined_call_operand.hbm [shape: f32[1,1], index: 2, kind: output, shape index: {}]
  %s3 = sld [smem:[#allocation0]]
  $region81: #{tpu_custom_call.1} parent=0
    _
  %s5 = ssub.s32 1, %s3
  %s6 = scalar_select 0, %s5, %s3
  $region1: #{tpu_custom_call.1} parent=0
    #allocation7 [shape = 'u8[4096]{0}', space=vmem, size = 0x1000, scoped, tag = 'input window, operand 0']
    #allocation8 [shape = 's32[2]{0}', space=sflag, size = 0x8, scoped, tag = 'scoped memory for tpu_custom_call.1']
    #allocation9 [shape = 's32[2]{0}', space=sflag, size = 0x8, scoped, tag = 'scoped memory for tpu_custom_call.1']
    #allocation10 [shape = 'u8[4096]{0}', space=vmem, size = 0x1000, scoped, tag = 'input window, operand 1']
    #allocation11 [shape = 's32[2]{0}', space=sflag, size = 0x8, scoped, tag = 'scoped memory for tpu_custom_call.1']
    #allocation12 [shape = 'u8[512]{0}', space=smem, size = 0x200, scoped, tag = 'output window, operand 0, single buffered']
    %7 = vsyncpa [#allocation8], 0
    %s8 = scalar_lea.sflag [#allocation8], 1
    %9 = vsyncpa %s8, 0
    %10 = vsyncpa [#allocation11], 0
    %s11 = scalar_lea.sflag [#allocation11], 1
    %12 = vsyncpa %s11, 0
    %13 = vsyncpa [#allocation9], 0
    loop: start=0, step=1, limit=4
    $region2: #{tpu_custom_call.1} parent=1 // loop_pre_header
      _
    $region3: #{tpu_custom_call.1} parent=1 // loop_header
      %s15 = sphi 0, %s19
      %p16 = scmp.ge.s32.totalorder %s15, 4
      %s22 = sphi 0, %s34
      %s23 = sphi 0, %s30
      %s24 = sphi 0, %s22
      %s25 = sphi 0, %s23
      %s26 = sphi 0, %s24
      %s27 = sphi 0, %s25
      %s41 = sphi 0, %s43
      %s44 = sphi 0, %s41
      %s45 = sphi 0, %s44
      %s61 = sphi 0, %s45
      %s71 = sphi 0, %s73
      %s74 = sphi 0, %s71
      %s75 = sphi 0, %s74
      %s91 = sphi 0, %s75
      %s95 = sphi 0, %s95
      %s97 = sphi 0, %s95
      %s98 = sphi 0, %s97
      %s112 = sphi 0, %s98
    $region4: #{tpu_custom_call.1} parent=1 // loop_header_branch
      %18 = sbr.rel (%p16) target = $region8
    $region5: #{tpu_custom_call.1} parent=1 // loop_body
      %s20 = ssub.s32 %s15, 1
      %s21 = ssub.s32 %s15, 2
      %s28 = sadd.s32 1, %s23
      %p29 = scmp.ge.s32.totalorder %s28, 1
      %s30 = scalar_select %p29, 0, %s28
      %s31 = sadd.s32 1, %s22
      %s32 = scalar_select %p29, %s31, %s22
      %p33 = scmp.ge.s32.totalorder %s32, 2
      %s34 = scalar_select %p33, 0, %s32
      %s35 = ssub.s32 1, %s22
      %s36 = smul.u32 %s35, %s23
      %s37 = ssub.s32 1, %s34
      %s38 = smul.u32 %s37, %s30
      %s39 = ssub.s32 %s36, %s38
      %p40 = scmp.eq.s32.totalorder %s39, 0
      %s42 = sadd.s32 %s41, 1
      %s43 = scalar_select %p40, %s41, %s42
      %p46 = pneg %p40
      %p47 = scmp.eq.s32.totalorder %s15, 1
      %p48 = por %p46, %p47
      %p49 = scmp.ne.s32.totalorder %s41, %s44
      %p50 = scmp.eq.s32.totalorder %s15, 0
      %p51 = por %p49, %p50
      %p52 = scmp.ne.s32.totalorder %s41, %s44
      %p53 = scmp.eq.s32.totalorder %s20, 1
      %p54 = por %p52, %p53
      %p55 = scmp.ne.s32.totalorder %s44, %s45
      %p56 = scmp.eq.s32.totalorder %s20, 0
      %p57 = por %p55, %p56
      %p58 = scmp.ne.s32.totalorder %s44, %s45
      %p59 = scmp.eq.s32.totalorder %s21, 1
      %p60 = por %p58, %p59
      %p62 = scmp.ne.s32.totalorder %s45, %s61
      %p63 = scmp.eq.s32.totalorder %s21, 0
      %p64 = por %p62, %p63
      %s65 = ssub.s32 1, %s22
      %s66 = smul.u32 %s65, %s23
      %s67 = ssub.s32 1, %s34
      %s68 = smul.u32 %s67, %s30
      %s69 = ssub.s32 %s66, %s68
      %p70 = scmp.eq.s32.totalorder %s69, 0
      %s72 = sadd.s32 %s71, 1
      %s73 = scalar_select %p70, %s71, %s72
      %p76 = pneg %p70
      %p77 = scmp.eq.s32.totalorder %s15, 1
      %p78 = por %p76, %p77
      %p79 = scmp.ne.s32.totalorder %s71, %s74
      %p80 = scmp.eq.s32.totalorder %s15, 0
      %p81 = por %p79, %p80
      %p82 = scmp.ne.s32.totalorder %s71, %s74
      %p83 = scmp.eq.s32.totalorder %s20, 1
      %p84 = por %p82, %p83
      %p85 = scmp.ne.s32.totalorder %s74, %s75
      %p86 = scmp.eq.s32.totalorder %s20, 0
      %p87 = por %p85, %p86
      %p88 = scmp.ne.s32.totalorder %s74, %s75
      %p89 = scmp.eq.s32.totalorder %s21, 1
      %p90 = por %p88, %p89
      %p92 = scmp.ne.s32.totalorder %s75, %s91
      %p93 = scmp.eq.s32.totalorder %s21, 0
      %p94 = por %p92, %p93
      %s96 = sadd.s32 %s95, 1
      %p99 = scmp.eq.s32.totalorder %s15, 1
      %p100 = scmp.ne.s32.totalorder %s95, %s97
      %p101 = scmp.eq.s32.totalorder %s15, 0
      %p102 = por %p100, %p101
      %p103 = scmp.ne.s32.totalorder %s95, %s97
      %p104 = scmp.eq.s32.totalorder %s20, 1
      %p105 = por %p103, %p104
      %p106 = scmp.ne.s32.totalorder %s97, %s98
      %p107 = scmp.eq.s32.totalorder %s20, 0
      %p108 = por %p106, %p107
      %p109 = scmp.ne.s32.totalorder %s97, %s98
      %p110 = scmp.eq.s32.totalorder %s21, 1
      %p111 = por %p109, %p110
      %p113 = scmp.ne.s32.totalorder %s98, %s112
      %p114 = scmp.eq.s32.totalorder %s21, 0
      %p115 = por %p113, %p114
      %p116 = scmp.le.s32.totalorder 1, %s15
      %p117 = scmp.lt.s32.totalorder %s15, 3
      %p118 = pnand %p116, %p117
      %p119 = pneg %p118
      // Predicated region
      $region9: #{tpu_custom_call.1} parent=5 // pred_check
        _
      $region10: #{tpu_custom_call.1} parent=5 // pred_check_branch
        %121 = sbr.rel (%p118) target = $region12
      $region11: #{tpu_custom_call.1} parent=5 // pred_region
        %s122 = ssub.s32 %s15, 1
      $region12: #{tpu_custom_call.1} parent=5 // pred_fallthru
        _
      %p123 = scmp.lt.s32.totalorder %s15, 2
      // Predicated region
      $region13: #{tpu_custom_call.1} parent=5 // pred_check
        %p124 = pneg %p123
      $region14: #{tpu_custom_call.1} parent=5 // pred_check_branch
        %126 = sbr.rel (%p124) target = $region16
      $region15: #{tpu_custom_call.1} parent=5 // pred_region
        // Predicated region
        $region17: #{tpu_custom_call.1} parent=15 // pred_check
          %p127 = pneg %p51
        $region18: #{tpu_custom_call.1} parent=15 // pred_check_branch
          %129 = sbr.rel (%p127) target = $region20
        $region19: #{tpu_custom_call.1} parent=15 // pred_region
          %s130 = sand.u32 %s41, 1
          %s131 = scalar_lea.sflag [#allocation8], %s130
          %s132 = sand.u32 %s41, 1
          %s133 = smul.addr %s132, 4
          %s134 = scalar_lea.vmem [#allocation7], %s133
          %s135 = ssub.s32 1, %s22
          %s136 = smul.u32 %s135, %s23
          %s138 = ssub.s32 64, 64
          %139 = vsyncadd %s131, %s138
          %s140 = smul.addr %s136, 64
          %s141 = scalar_lea.hbm %s0, %s140
          %s143 = sshll.u32 %s134, 4
          %s144 = int_to_ptr.vmem [resolvable:$true] %s143
          %146 = dma.hbm_to_vmem [thread:$0]  %s141, 64, %s144, %s131
        $region20: #{tpu_custom_call.1} parent=15 // pred_fallthru
          _
        // Predicated region
        $region21: #{tpu_custom_call.1} parent=15 // pred_check
          %p147 = pneg %p81
        $region22: #{tpu_custom_call.1} parent=15 // pred_check_branch
          %149 = sbr.rel (%p147) target = $region24
        $region23: #{tpu_custom_call.1} parent=15 // pred_region
          %s150 = sand.u32 %s71, 1
          %s151 = scalar_lea.sflag [#allocation11], %s150
          %s152 = sand.u32 %s71, 1
          %s153 = smul.addr %s152, 4
          %s154 = scalar_lea.vmem [#allocation10], %s153
          %s155 = ssub.s32 1, %s22
          %s156 = smul.u32 %s155, %s23
          %s158 = ssub.s32 64, 64
          %159 = vsyncadd %s151, %s158
          %s160 = smul.addr %s156, 64
          %s161 = scalar_lea.hbm %s1, %s160
          %s163 = sshll.u32 %s154, 4
          %s164 = int_to_ptr.vmem [resolvable:$true] %s163
          %166 = dma.hbm_to_vmem [thread:$0]  %s161, 64, %s164, %s151
        $region24: #{tpu_custom_call.1} parent=15 // pred_fallthru
          _
      $region16: #{tpu_custom_call.1} parent=5 // pred_fallthru
        _
      %p167 = scmp.le.s32.totalorder 1, %s15
      %p168 = scmp.lt.s32.totalorder %s15, 3
      %p169 = pnand %p167, %p168
      %p170 = pneg %p169
      // Predicated region
      $region25: #{tpu_custom_call.1} parent=5 // pred_check
        _
      $region26: #{tpu_custom_call.1} parent=5 // pred_check_branch
        %172 = sbr.rel (%p169) target = $region28
      $region27: #{tpu_custom_call.1} parent=5 // pred_region
        %s173 = ssub.s32 %s15, 1
        %s174 = sand.u32 %s44, 1
        %s175 = scalar_lea.sflag [#allocation8], %s174
        %s176 = sand.u32 %s44, 1
        %s177 = smul.addr %s176, 4
        %s178 = scalar_lea.vmem [#allocation7], %s177
        // Predicated region
        $region29: #{tpu_custom_call.1} parent=27 // pred_check
          %p179 = pneg %p57
        $region30: #{tpu_custom_call.1} parent=27 // pred_check_branch
          %181 = sbr.rel (%p179) target = $region32
        $region31: #{tpu_custom_call.1} parent=27 // pred_region
          %182 = dma.done %s175, 64
        $region32: #{tpu_custom_call.1} parent=27 // pred_fallthru
          _
        %s183 = sand.u32 %s74, 1
        %s184 = scalar_lea.sflag [#allocation11], %s183
        %s185 = sand.u32 %s74, 1
        %s186 = smul.addr %s185, 4
        %s187 = scalar_lea.vmem [#allocation10], %s186
        // Predicated region
        $region33: #{tpu_custom_call.1} parent=27 // pred_check
          %p188 = pneg %p87
        $region34: #{tpu_custom_call.1} parent=27 // pred_check_branch
          %190 = sbr.rel (%p188) target = $region36
        $region35: #{tpu_custom_call.1} parent=27 // pred_region
          %191 = dma.done %s184, 64
        $region36: #{tpu_custom_call.1} parent=27 // pred_fallthru
          _
        %s192 = sand.u32 %s44, 1
        %s193 = scalar_lea.sflag [#allocation8], %s192
        %s194 = sand.u32 %s44, 1
        %s195 = smul.addr %s194, 4
        %s196 = scalar_lea.vmem [#allocation7], %s195
        %p197 = pneg %p57
        %p198 = pneg %p54
        %s199 = sand.u32 %s74, 1
        %s200 = scalar_lea.sflag [#allocation11], %s199
        %s201 = sand.u32 %s74, 1
        %s202 = smul.addr %s201, 4
        %s203 = scalar_lea.vmem [#allocation10], %s202
        %p204 = pneg %p87
        %p205 = pneg %p84
        %p206 = pneg %p108
        %p207 = pneg %p105
        %s208 = ssub.s32 1, %s24
        %s209 = smul.u32 %s208, %s25
        %s210 = ssub.s32 1, %s24
        %s211 = smul.u32 %s210, %s25
        %p212 = scmp.eq.s32.totalorder %s25, 0
        %p213 = scmp.eq.s32.totalorder %s24, 0
        %p214 = pnand %p213, %p212
        %p215 = pneg %p214
        // Predicated region
        $region37: #{tpu_custom_call.1} parent=27 // pred_check
          _
        $region38: #{tpu_custom_call.1} parent=27 // pred_check_branch
          %217 = sbr.rel (%p214) target = $region40
        $region39: #{tpu_custom_call.1} parent=27 // pred_region
          %218 = vst [vmem:[#allocation3] sm:$0x1] -inf
          %219 = vst [vmem:[#allocation4] sm:$0x1] 0.0
          %220 = vst [vmem:[#allocation5] sm:$0x1] 0.0
          %221 = vst [vmem:[#allocation6] sm:$0x1] 0.0
        $region40: #{tpu_custom_call.1} parent=27 // pred_fallthru
          _
        // Predicated region
        $region41: #{tpu_custom_call.1} parent=27 // pred_check
          %p222 = pneg %p213
        $region42: #{tpu_custom_call.1} parent=27 // pred_check_branch
          %224 = sbr.rel (%p222) target = $region44
        $region43: #{tpu_custom_call.1} parent=27 // pred_region
          %v225 = vld [vmem:[%s178] sm:$0xf]
          %v226 = vld [vmem:[%s187] sm:$0xf]
          %v227 = vsub.f32 %v225, %v226
          %v228 = vand.u32 2147483647, %v227
          %s229 = smul.u32 %s25, 4
          %s230 = scalar_lea.vmem [#allocation2], %s229
          %231 = vst [vmem:[%s230] sm:$0xf] %v228
          %p232 = scmp.ne.s32.totalorder %s25, 0
          // Predicated region
          $region45: #{tpu_custom_call.1} parent=43 // pred_check
            %p233 = pneg %p232
          $region46: #{tpu_custom_call.1} parent=43 // pred_check_branch
            %235 = sbr.rel (%p233) target = $region48
          $region47: #{tpu_custom_call.1} parent=43 // pred_region
            %v236 = vld [vmem:[#allocation3] sm:$0x1]
            %vm237 = vcmask 1043456
            %v238 = vsel %vm237, %v227, -inf
            %v239 = vrot.slane %v238, 4
            %v240 = vmax.f32 %v238, %v239
            %v241 = vrot.slane %v240, 2
            %v242 = vmax.f32 %v240, %v241
            %v243 = vrot.slane %v242, 1
            %v244 = vmax.f32 %v242, %v243
            %v245 = vmax.f32 %v236, %v244
            %246 = vst [vmem:[#allocation3] sm:$0x1] %v245
            %v247 = vld [vmem:[#allocation4] sm:$0x1]
            %v248 = vsel %vm237, %v228, 0.0
            %v249 = vrot.slane %v248, 4
            %v250 = vadd.f32 %v248, %v249
            %v251 = vrot.slane %v250, 2
            %v252 = vadd.f32 %v250, %v251
            %v253 = vrot.slane %v252, 1
            %v254 = vadd.f32 %v252, %v253
            %v255 = vadd.f32 %v247, %v254
            %256 = vst [vmem:[#allocation4] sm:$0x1] %v255
          $region48: #{tpu_custom_call.1} parent=43 // pred_fallthru
            _
          // Predicated region
          $region49: #{tpu_custom_call.1} parent=43 // pred_check
            %p257 = pneg %p212
          $region50: #{tpu_custom_call.1} parent=43 // pred_check_branch
            %259 = sbr.rel (%p257) target = $region52
          $region51: #{tpu_custom_call.1} parent=43 // pred_region
            %v260 = vlaneseq
            %v261 = vshrl.u32 %v260, 7
            %v262 = vlaneseq
            %v263 = vand.u32 %v262, 127
            %v264 = vstv %s229
            %v265 = vadd.s32 %v264, %v261
            %v266 = vmul.u32 %v265, 128
            %v267 = vadd.s32 %v266, %v263
            %vm268 = vcmp.lt.s32.totalorder %v267, 512
            %v269 = vsel %vm268, %v227, -inf
            %v270 = vsel %vm268, %v228, 0.0
            %v271 = vld [vmem:[#allocation3] sm:$0x1]
            %vm272 = vcmask 1043456
            %v273 = vsel %vm272, %v269, -inf
            %v274 = vrot.slane %v273, 4
            %v275 = vmax.f32 %v273, %v274
            %v276 = vrot.slane %v275, 2
            %v277 = vmax.f32 %v275, %v276
            %v278 = vrot.slane %v277, 1
            %v279 = vmax.f32 %v277, %v278
            %v280 = vmax.f32 %v271, %v279
            %281 = vst [vmem:[#allocation3] sm:$0x1] %v280
            %v282 = vld [vmem:[#allocation4] sm:$0x1]
            %v283 = vsel %vm272, %v270, 0.0
            %v284 = vrot.slane %v283, 4
            %v285 = vadd.f32 %v283, %v284
            %v286 = vrot.slane %v285, 2
            %v287 = vadd.f32 %v285, %v286
            %v288 = vrot.slane %v287, 1
            %v289 = vadd.f32 %v287, %v288
            %v290 = vadd.f32 %v282, %v289
            %291 = vst [vmem:[#allocation4] sm:$0x1] %v290
          $region52: #{tpu_custom_call.1} parent=43 // pred_fallthru
            _
        $region44: #{tpu_custom_call.1} parent=27 // pred_fallthru
          _
        %p292 = scmp.eq.s32.totalorder %s24, 1
        // Predicated region
        $region53: #{tpu_custom_call.1} parent=27 // pred_check
          %p293 = pneg %p292
        $region54: #{tpu_custom_call.1} parent=27 // pred_check_branch
          %295 = sbr.rel (%p293) target = $region56
        $region55: #{tpu_custom_call.1} parent=27 // pred_region
          %v296 = vld [vmem:[#allocation3] sm:$0x1]
          %vm297 = vcmask 1040384
          %v298 = vsel %vm297, %v296, -inf
          %299 = vmax.xlane.f32.xlu0 %v298
          %v300 = vpop.xlane.xlu0 %299
          %v301 = vrot.slane %v300, 4
          %v302 = vmax.f32 %v300, %v301
          %v303 = vrot.slane %v302, 2
          %v304 = vmax.f32 %v302, %v303
          %v305 = vrot.slane %v304, 1
          %v306 = vmax.f32 %v304, %v305
          %s307 = vtos %v306
          %s308 = smul.f32 %s307, 0.2
          %s309 = smul.u32 %s25, 4
          %s310 = scalar_lea.vmem [#allocation2], %s309
          %v311 = vld [vmem:[%s310] sm:$0xf]
          %p312 = scmp.ne.s32.totalorder %s25, 0
          // Predicated region
          $region57: #{tpu_custom_call.1} parent=55 // pred_check
            %p313 = pneg %p312
          $region58: #{tpu_custom_call.1} parent=55 // pred_check_branch
            %315 = sbr.rel (%p313) target = $region60
          $region59: #{tpu_custom_call.1} parent=55 // pred_region
            %v316 = vstv %s308
            %vm317 = vcmp.gt.f32.partialorder %v311, %v316
            %v318 = vld [vmem:[#allocation5] sm:$0x1]
            %v319 = vmul.f32 %v311, %v311
            %v320 = vsel %vm317, %v319, 0.0
            %vm321 = vcmask 1043456
            %v322 = vsel %vm321, %v320, 0.0
            %v323 = vrot.slane %v322, 4
            %v324 = vadd.f32 %v322, %v323
            %v325 = vrot.slane %v324, 2
            %v326 = vadd.f32 %v324, %v325
            %v327 = vrot.slane %v326, 1
            %v328 = vadd.f32 %v326, %v327
            %v329 = vadd.f32 %v318, %v328
            %330 = vst [vmem:[#allocation5] sm:$0x1] %v329
            %v331 = vld [vmem:[#allocation6] sm:$0x1]
            %v332 = vsel %vm317, 1, 0
            %v333 = vcvt.s32.f32 %v332
            %v334 = vsel %vm321, %v333, 0.0
            %v335 = vrot.slane %v334, 4
            %v336 = vadd.f32 %v334, %v335
            %v337 = vrot.slane %v336, 2
            %v338 = vadd.f32 %v336, %v337
            %v339 = vrot.slane %v338, 1
            %v340 = vadd.f32 %v338, %v339
            %v341 = vadd.f32 %v331, %v340
            %342 = vst [vmem:[#allocation6] sm:$0x1] %v341
          $region60: #{tpu_custom_call.1} parent=55 // pred_fallthru
            _
          // Predicated region
          $region61: #{tpu_custom_call.1} parent=55 // pred_check
            %p343 = pneg %p212
          $region62: #{tpu_custom_call.1} parent=55 // pred_check_branch
            %345 = sbr.rel (%p343) target = $region64
          $region63: #{tpu_custom_call.1} parent=55 // pred_region
            %v346 = vstv %s308
            %vm347 = vcmp.gt.f32.partialorder %v311, %v346
            %v348 = vlaneseq
            %v349 = vshrl.u32 %v348, 7
            %v350 = vlaneseq
            %v351 = vand.u32 %v350, 127
            %v352 = vstv %s309
            %v353 = vadd.s32 %v352, %v349
            %v354 = vmul.u32 %v353, 128
            %v355 = vadd.s32 %v354, %v351
            %vm356 = vcmp.lt.s32.totalorder %v355, 512
            %vm357 = vmand %vm347, %vm356
            %v358 = vld [vmem:[#allocation5] sm:$0x1]
            %v359 = vmul.f32 %v311, %v311
            %v360 = vsel %vm357, %v359, 0.0
            %vm361 = vcmask 1043456
            %v362 = vsel %vm361, %v360, 0.0
            %v363 = vrot.slane %v362, 4
            %v364 = vadd.f32 %v362, %v363
            %v365 = vrot.slane %v364, 2
            %v366 = vadd.f32 %v364, %v365
            %v367 = vrot.slane %v366, 1
            %v368 = vadd.f32 %v366, %v367
            %v369 = vadd.f32 %v358, %v368
            %370 = vst [vmem:[#allocation5] sm:$0x1] %v369
            %v371 = vld [vmem:[#allocation6] sm:$0x1]
            %v372 = vsel %vm357, 1, 0
            %v373 = vcvt.s32.f32 %v372
            %v374 = vsel %vm361, %v373, 0.0
            %v375 = vrot.slane %v374, 4
            %v376 = vadd.f32 %v374, %v375
            %v377 = vrot.slane %v376, 2
            %v378 = vadd.f32 %v376, %v377
            %v379 = vrot.slane %v378, 1
            %v380 = vadd.f32 %v378, %v379
            %v381 = vadd.f32 %v371, %v380
            %382 = vst [vmem:[#allocation6] sm:$0x1] %v381
          $region64: #{tpu_custom_call.1} parent=55 // pred_fallthru
            _
        $region56: #{tpu_custom_call.1} parent=27 // pred_fallthru
          _
        %p383 = pnand %p292, %p212
        %p384 = pneg %p383
        // Predicated region
        $region65: #{tpu_custom_call.1} parent=27 // pred_check
          _
        $region66: #{tpu_custom_call.1} parent=27 // pred_check_branch
          %386 = sbr.rel (%p383) target = $region68
        $region67: #{tpu_custom_call.1} parent=27 // pred_region
          %v387 = vld [vmem:[#allocation4] sm:$0x1]
          %vm388 = vcmask 1040384
          %v389 = vsel %vm388, %v387, 0.0
          %390 = vadd.xlane.f32.xlu0 %v389
          %v391 = vpop.xlane.xlu0 %390
          %v392 = vrot.slane %v391, 4
          %v393 = vadd.f32 %v391, %v392
          %v394 = vrot.slane %v393, 2
          %v395 = vadd.f32 %v393, %v394
          %v396 = vrot.slane %v395, 1
          %v397 = vadd.f32 %v395, %v396
          %s398 = vtos %v397
          %v399 = vld [vmem:[#allocation5] sm:$0x1]
          %v400 = vsel %vm388, %v399, 0.0
          %401 = vadd.xlane.f32.xlu0 %v400
          %v402 = vpop.xlane.xlu0 %401
          %v403 = vrot.slane %v402, 4
          %v404 = vadd.f32 %v402, %v403
          %v405 = vrot.slane %v404, 2
          %v406 = vadd.f32 %v404, %v405
          %v407 = vrot.slane %v406, 1
          %v408 = vadd.f32 %v406, %v407
          %s409 = vtos %v408
          %s410 = sadd.f32 %s398, %s409
          %v411 = vld [vmem:[#allocation6] sm:$0x1]
          %v412 = vsel %vm388, %v411, 0.0
          %413 = vadd.xlane.f32.xlu0 %v412
          %v414 = vpop.xlane.xlu0 %413
          %v415 = vrot.slane %v414, 4
          %v416 = vadd.f32 %v414, %v415
          %v417 = vrot.slane %v416, 2
          %v418 = vadd.f32 %v416, %v417
          %v419 = vrot.slane %v418, 1
          %v420 = vadd.f32 %v418, %v419
          %s421 = vtos %v420
          %s422 = sadd.f32 %s421, 512.0
          %v423 = vstv %s422
          %v424 = vrcp.pop %v423
          %s425 = vtos %v424
          %s426 = smul.f32 %s410, %s425
          %s427 = scalar_lea.smem [#allocation12], 0
          %428 = sst [smem:[%s427]] %s426
        $region68: #{tpu_custom_call.1} parent=27 // pred_fallthru
          _
        // Predicated region
        $region69: #{tpu_custom_call.1} parent=27 // pred_check
          %p429 = pneg %p105
        $region70: #{tpu_custom_call.1} parent=27 // pred_check_branch
          %431 = sbr.rel (%p429) target = $region72
        $region71: #{tpu_custom_call.1} parent=27 // pred_region
          %s433 = ssub.s32 16, 16
          %434 = vsyncadd [#allocation9], %s433
          %437 = dma.smem_to_hbm [#allocation12], 16, %s2, [#allocation9]
        $region72: #{tpu_custom_call.1} parent=27 // pred_fallthru
          _
        // Predicated region
        $region73: #{tpu_custom_call.1} parent=27 // pred_check
          %p438 = pneg %p105
        $region74: #{tpu_custom_call.1} parent=27 // pred_check_branch
          %440 = sbr.rel (%p438) target = $region76
        $region75: #{tpu_custom_call.1} parent=27 // pred_region
          %441 = dma.done [#allocation9], 16
        $region76: #{tpu_custom_call.1} parent=27 // pred_fallthru
          _
        %442 = sfence
      $region28: #{tpu_custom_call.1} parent=5 // pred_fallthru
        _
      %p443 = scmp.le.s32.totalorder 2, %s15
      // Predicated region
      $region77: #{tpu_custom_call.1} parent=5 // pred_check
        %p444 = pneg %p443
      $region78: #{tpu_custom_call.1} parent=5 // pred_check_branch
        %446 = sbr.rel (%p444) target = $region80
      $region79: #{tpu_custom_call.1} parent=5 // pred_region
        %s447 = ssub.s32 %s15, 2
      $region80: #{tpu_custom_call.1} parent=5 // pred_fallthru
        _
    $region6: #{tpu_custom_call.1} parent=1 // loop_footer
      %s19 = sadd.s32 1, %s15
    $region7: #{tpu_custom_call.1} parent=1 // loop_footer_branch
      %14 = sbr.rel target = $region3
    $region8: #{tpu_custom_call.1} parent=1 // loop_exit
      _
    %448 = vsyncpa [#allocation8], 1
    %s449 = scalar_lea.sflag [#allocation8], 1
    %450 = vsyncpa %s449, 1
    %451 = vsyncpa [#allocation11], 1
    %s452 = scalar_lea.sflag [#allocation11], 1
    %453 = vsyncpa %s452, 1
    %454 = vsyncpa [#allocation9], 1
    %s455 = scalar_lea.sflag [#allocation9], 1
    %456 = vsyncpa %s455, 1

</llo_original>
